<compile_context>
chip_gen: v7x
topology: tpu7x:2x2x1
jax: 0.10.0
libtpu: 0.0.40
codegen_flags: <defaults>
</compile_context>

<pallas_src>
import functools

import numpy as np
import jax
import jax.numpy as jnp
from jax.experimental import pallas as pl
from jax.experimental.pallas import tpu as pltpu


# ----------------------------------------------------------------------------
# Parameter construction (deterministic, mirrors ControlNet.__init__ exactly,
# but emits the weight pre-transposed as (in_features, out_features) in bf16).
# ----------------------------------------------------------------------------
def build_controlnet_weight_t(N, M):
    """ControlNet sparse weight, pre-transposed to (in, out), bfloat16."""
    D = N * M
    p_base_line = 0.03
    p_mirror_line = 0.5
    p_gap = (p_mirror_line - p_base_line) / 2
    mirror = int(M / 2)
    gap = int(M * p_gap)
    base_left = mirror - 2 * gap
    middle_right = mirror + gap

    wt = np.zeros((D, D), dtype=np.float32)  # (in_features, out_features) == W^T
    for i in range(N):
        for j in range(M):
            if j <= mirror:
                oj = M - 1 - int(j * base_left / mirror)
                oi = int((i - N / 2) * j / mirror + N / 2)
            elif j < middle_right:
                oj = M - 1 - (j - mirror + base_left)
                oi = i
            else:
                oj, oi = j, i
            input_index = i * M + j
            output_index = oi * M + oj
            # (original also zeroes the column first; wt already starts at 0)
            wt[input_index, output_index] = 4.0
    # 0.0 and 4.0 are exactly representable in bf16 -> lossless, half the bytes.
    return jnp.asarray(wt, dtype=jnp.bfloat16)


# ----------------------------------------------------------------------------
# Pallas kernel: out = x @ W_t + b   (torch.nn.Linear hot path, W_t = W^T)
# ----------------------------------------------------------------------------
def linear_kernel(x_ref, w_ref, b_ref, o_ref):
    w = w_ref[...]
    if w.dtype != jnp.float32:
        # Exact widening (weight only holds 0.0 / 4.0).  This branch is only
        # taken on the no-grid fast path, so the cast traces/runs exactly once;
        # the batched grid path feeds an already-f32 weight (no per-step cast).
        w = w.astype(jnp.float32)
    acc = jnp.dot(x_ref[...], w,
                  preferred_element_type=jnp.float32,
                  precision=jax.lax.Precision.HIGHEST)
    o_ref[...] = (acc + b_ref[...]).astype(o_ref.dtype)


# ----------------------------------------------------------------------------
# Forward wrapper (single jitted executable: reshape + pallas_call + reshape)
# ----------------------------------------------------------------------------
@functools.partial(jax.jit, static_argnames=("N", "M", "block_b"))
def controlnet_forward(x, weight_t, bias, *, N, M, block_b=256):
    """x: (..., N, M) or (B, N*M).  weight_t: (N*M, N*M) pre-transposed (bf16).
    Returns (B, N, M) float32."""
    D = N * M
    x2 = x.reshape(-1, D).astype(jnp.float32)   # (B, D)
    B = x2.shape[0]
    b2 = bias.reshape(1, D).astype(jnp.float32)

    if B <= block_b:
        # ---- Small-batch fast path: one block, no grid, no pad, no slice ----
        # block_shape == full array dims, so the (8,128) rule is satisfied even
        # though B is tiny.
        cost = pl.CostEstimate(
            flops=2 * B * D * D,
            transcendentals=0,
            bytes_accessed=4 * (2 * B * D) + 2 * D * D + 4 * D,
        )
        out = pl.pallas_call(
            linear_kernel,
            out_shape=jax.ShapeDtypeStruct((B, D), jnp.float32),
            in_specs=[
                pl.BlockSpec((B, D), lambda: (0, 0)),   # whole batch
                pl.BlockSpec((D, D), lambda: (0, 0)),   # bf16 weight
                pl.BlockSpec((1, D), lambda: (0, 0)),   # bias
            ],
            out_specs=pl.BlockSpec((B, D), lambda: (0, 0)),
            cost_estimate=cost,
        )(x2, weight_t, b2)
        return out.reshape(-1, N, M)

    # ---- Large-batch path: row-tiled grid, megacore-shardable -------------
    # Widen the bf16 weight ONCE inside the jitted wrapper (not per grid step);
    # it stays resident in VMEM (constant index_map) and is single-buffered.
    wt_f32 = weight_t.astype(jnp.float32)
    Bp = ((B + block_b - 1) // block_b) * block_b
    if Bp != B:
        x2 = jnp.pad(x2, ((0, Bp - B), (0, 0)))

    grid = (Bp // block_b,)
    cost = pl.CostEstimate(
        flops=2 * Bp * D * D,
        transcendentals=0,
        bytes_accessed=4 * (2 * Bp * D) + 4 * D * D + 4 * D,
    )
    out = pl.pallas_call(
        linear_kernel,
        out_shape=jax.ShapeDtypeStruct((Bp, D), jnp.float32),
        grid=grid,
        in_specs=[
            pl.BlockSpec((block_b, D), lambda i: (i, 0)),                # x rows / step
            pl.BlockSpec((D, D), lambda i: (0, 0),
                         pipeline_mode=pl.Buffered(1)),                  # resident weight
            pl.BlockSpec((1, D), lambda i: (0, 0),
                         pipeline_mode=pl.Buffered(1)),                  # resident bias
        ],
        out_specs=pl.BlockSpec((block_b, D), lambda i: (i, 0)),
        compiler_params=pltpu.CompilerParams(
            dimension_semantics=("parallel",),   # >=2 steps here => v7x megacore can split
        ),
        cost_estimate=cost,
    )(x2, wt_f32, b2)
    return out[:B].reshape(-1, N, M)


# ----------------------------------------------------------------------------
# Driver
# ----------------------------------------------------------------------------
if __name__ == "__main__":
    N, M = 8, 16              # input_size = output_size = 128
    B = 2

    key = jax.random.PRNGKey(0)
    kx, kb = jax.random.split(key)

    x = jax.random.normal(kx, (B, N, M), dtype=jnp.float32)

    weight_t = build_controlnet_weight_t(N, M)        # (in, out) bf16
    # torch.nn.Linear default bias ~ U(-1/sqrt(in), 1/sqrt(in)); deterministic here.
    bound = 1.0 / np.sqrt(N * M)
    bias = jax.random.uniform(kb, (N * M,), dtype=jnp.float32,
                              minval=-bound, maxval=bound)

    y = controlnet_forward(x, weight_t, bias, N=N, M=M)
    y = jax.block_until_ready(y)

    # Pure-f32 reference (same math as torch.nn.Linear with this weight; the
    # bf16 -> f32 widening of the weight is exact because it holds only 0/4).
    x_np = np.asarray(x, dtype=np.float32).reshape(-1, N * M)
    w_np = np.asarray(weight_t.astype(jnp.float32))    # (in, out) == W^T
    b_np = np.asarray(bias, dtype=np.float32)
    ref = (x_np @ w_np + b_np).reshape(-1, N, M)

    assert y.shape == (B, N, M)
    np.testing.assert_allclose(np.asarray(y), ref, atol=1e-5, rtol=1e-5)

    print("KERNEL_OK")
</pallas_src>

<mosaic_0001>
module attributes {stable_mosaic.version = 11 : i64} {
  func.func @linear_kernel(%arg0: memref<2x128xf32, #tpu.memory_space<vmem>>, %arg1: memref<128x128xbf16, #tpu.memory_space<vmem>>, %arg2: memref<1x128xf32, #tpu.memory_space<vmem>>, %arg3: memref<2x128xf32, #tpu.memory_space<vmem>>) attributes {dimension_semantics = [], scalar_prefetch = 0 : i64, scratch_operands = 0 : i64, tpu.core_type = #tpu.core_type<tc>} {
    %c0 = arith.constant 0 : index
    %c0_0 = arith.constant 0 : index
    %0 = vector.load %arg1[%c0, %c0_0] : memref<128x128xbf16, #tpu.memory_space<vmem>>, vector<128x128xbf16>
    %1 = arith.extf %0 : vector<128x128xbf16> to vector<128x128xf32>
    %c0_1 = arith.constant 0 : index
    %c0_2 = arith.constant 0 : index
    %2 = vector.load %arg0[%c0_1, %c0_2] : memref<2x128xf32, #tpu.memory_space<vmem>>, vector<2x128xf32>
    %cst = arith.constant dense<0.000000e+00> : vector<2x128xf32>
    %3 = tpu.matmul %2, %1, %cst {dimension_numbers = #tpu.dot_dimension_numbers<[1], [0], [0], [1], [0, 0, 1, 1], [], []>, precision = #tpu.contract_precision<fp32>} : vector<2x128xf32>, vector<128x128xf32>, vector<2x128xf32> -> vector<2x128xf32>
    %c0_3 = arith.constant 0 : index
    %c0_4 = arith.constant 0 : index
    %4 = vector.load %arg2[%c0_3, %c0_4] : memref<1x128xf32, #tpu.memory_space<vmem>>, vector<1x128xf32>
    %5 = vector.broadcast %4 : vector<1x128xf32> to vector<2x128xf32>
    %6 = arith.addf %3, %5 : vector<2x128xf32>
    %c0_5 = arith.constant 0 : index
    %c0_6 = arith.constant 0 : index
    %7 = vector.load %arg3[%c0_5, %c0_6] : memref<2x128xf32, #tpu.memory_space<vmem>>, vector<2x128xf32>
    tpu.vector_store %arg3[%c0_5, %c0_6], %6 {strides = array<i32>} : memref<2x128xf32, #tpu.memory_space<vmem>>, vector<2x128xf32>,
    return
  }
}

</mosaic_0001>

<llo_original>
// kernel: controlnet_forward.1
$region0: #{controlnet_forward.1}
  #allocation0 [shape = 'u32[]', space=smem, size = 0x4, offset = 0x4, fixed_abs, tag = 'smem constant byte address 0x4 - core index']
  #allocation1 [shape = 'u32[144,128]{1,0:T(1,128)}', space=vmem, size = 0x12000, scoped, tag = 'internal scratch']
  %s0 = inlined_call_operand.vmem [shape: f32[2,128], index: 0, kind: input, shape index: {}]
  %s1 = inlined_call_operand.hbm [shape: bf16[128,128], index: 1, kind: input, shape index: {}]
  %s2 = inlined_call_operand.vmem [shape: f32[1,128], index: 2, kind: input, shape index: {}]
  %s3 = inlined_call_operand.vmem [shape: f32[2,128], index: 3, kind: output, shape index: {}]
  %s4 = sld [smem:[#allocation0]]
  $region26: #{controlnet_forward.1} parent=0
    _
  %s6 = ssub.s32 1, %s4
  %s7 = scalar_select 0, %s6, %s4
  $region1: #{controlnet_forward.1} parent=0
    #allocation2 [shape = 'u8[32768]{0}', space=vmem, size = 0x8000, scoped, tag = 'input window, operand 1, single buffered']
    #allocation3 [shape = 's32[1]{0}', space=sflag, size = 0x4, scoped, tag = 'scoped memory for controlnet_forward.1']
    %8 = vsyncpa [#allocation3], 0
    // Predicated region
    $region2: #{controlnet_forward.1} parent=1 // pred_check
      _
    $region3: #{controlnet_forward.1} parent=1 // pred_check_branch
      %10 = sbr.rel (0) target = $region5
    $region4: #{controlnet_forward.1} parent=1 // pred_region
      _
    $region5: #{controlnet_forward.1} parent=1 // pred_fallthru
      _
    // Predicated region
    $region6: #{controlnet_forward.1} parent=1 // pred_check
      _
    $region7: #{controlnet_forward.1} parent=1 // pred_check_branch
      %12 = sbr.rel (0) target = $region9
    $region8: #{controlnet_forward.1} parent=1 // pred_region
      %s14 = ssub.s32 1024, 1024
      %15 = vsyncadd [#allocation3], %s14
      %s16 = sshll.u32 [#allocation2], 4
      %s17 = int_to_ptr.vmem [resolvable:$true] %s16
      %22 = dma.hbm_to_vmem [thread:$0]  %s1, 1024, %s17, [#allocation3], 64, 64, 4
    $region9: #{controlnet_forward.1} parent=1 // pred_fallthru
      _
    // Predicated region
    $region10: #{controlnet_forward.1} parent=1 // pred_check
      _
    $region11: #{controlnet_forward.1} parent=1 // pred_check_branch
      %24 = sbr.rel (0) target = $region13
    $region12: #{controlnet_forward.1} parent=1 // pred_region
      _
    $region13: #{controlnet_forward.1} parent=1 // pred_fallthru
      _
    // Predicated region
    $region14: #{controlnet_forward.1} parent=1 // pred_check
      _
    $region15: #{controlnet_forward.1} parent=1 // pred_check_branch
      %26 = sbr.rel (0) target = $region17
    $region16: #{controlnet_forward.1} parent=1 // pred_region
      %27 = dma.done [#allocation3], 1024
    $region17: #{controlnet_forward.1} parent=1 // pred_fallthru
      _
    %v28 = vld [vmem:[#allocation2] sm:$0xf]
    %v29 = vld [vmem:[#allocation2 + $0x4] sm:$0xf]
    %v30 = vld [vmem:[#allocation2 + $0x8] sm:$0xf]
    %v31 = vld [vmem:[#allocation2 + $0xc] sm:$0xf]
    %v32 = vld [vmem:[#allocation2 + $0x10] sm:$0xf]
    %v33 = vld [vmem:[#allocation2 + $0x14] sm:$0xf]
    %v34 = vld [vmem:[#allocation2 + $0x18] sm:$0xf]
    %v35 = vld [vmem:[#allocation2 + $0x1c] sm:$0xf]
    %v36 = vld [vmem:[#allocation2 + $0x20] sm:$0xf]
    %v37 = vld [vmem:[#allocation2 + $0x24] sm:$0xf]
    %v38 = vld [vmem:[#allocation2 + $0x28] sm:$0xf]
    %v39 = vld [vmem:[#allocation2 + $0x2c] sm:$0xf]
    %v40 = vld [vmem:[#allocation2 + $0x30] sm:$0xf]
    %v41 = vld [vmem:[#allocation2 + $0x34] sm:$0xf]
    %v42 = vld [vmem:[#allocation2 + $0x38] sm:$0xf]
    %v43 = vld [vmem:[#allocation2 + $0x3c] sm:$0xf]
    %v44 = vunpack.c.l.bf16 %v28
    %v45 = vunpack.c.l.bf16 %v29
    %v46 = vunpack.c.l.bf16 %v30
    %v47 = vunpack.c.l.bf16 %v31
    %v48 = vunpack.c.l.bf16 %v32
    %v49 = vunpack.c.l.bf16 %v33
    %v50 = vunpack.c.l.bf16 %v34
    %v51 = vunpack.c.l.bf16 %v35
    %v52 = vunpack.c.l.bf16 %v36
    %v53 = vunpack.c.l.bf16 %v37
    %v54 = vunpack.c.l.bf16 %v38
    %v55 = vunpack.c.l.bf16 %v39
    %v56 = vunpack.c.l.bf16 %v40
    %v57 = vunpack.c.l.bf16 %v41
    %v58 = vunpack.c.l.bf16 %v42
    %v59 = vunpack.c.l.bf16 %v43
    %v60 = vld [vmem:[%s0] sm:$0x3]
    %v61 = vld [vmem:[%s2] sm:$0x1]
    %v63 = vlaneseq
    %v64 = vshrl.u32 %v63, 7
    %v65 = vsub.s32 0, %v64
    %v66 = vrot.slane %v61, %v65
    %68 = vmatprep.subr.mxu0 0.0
    %69 = vmatpush1.msra.mxu0 %v44
    %70 = vmatprep.subr.mxu0 0.0
    %71 = vmatpush1.msra.mxu0 %v45
    %72 = vmatprep.subr.mxu0 0.0
    %73 = vmatpush1.msra.mxu0 %v46
    %74 = vmatprep.subr.mxu0 0.0
    %75 = vmatpush1.msra.mxu0 %v47
    %76 = vmatprep.subr.mxu0 0.0
    %77 = vmatpush1.msra.mxu0 %v48
    %78 = vmatprep.subr.mxu0 0.0
    %79 = vmatpush1.msra.mxu0 %v49
    %80 = vmatprep.subr.mxu0 0.0
    %81 = vmatpush1.msra.mxu0 %v50
    %82 = vmatprep.subr.mxu0 0.0
    %83 = vmatpush1.msra.mxu0 %v51
    %84 = vmatprep.subr.mxu0 0.0
    %85 = vmatpush1.msra.mxu0 %v52
    %86 = vmatprep.subr.mxu0 0.0
    %87 = vmatpush1.msra.mxu0 %v53
    %88 = vmatprep.subr.mxu0 0.0
    %89 = vmatpush1.msra.mxu0 %v54
    %90 = vmatprep.subr.mxu0 0.0
    %91 = vmatpush1.msra.mxu0 %v55
    %92 = vmatprep.subr.mxu0 0.0
    %93 = vmatpush1.msra.mxu0 %v56
    %94 = vmatprep.subr.mxu0 0.0
    %95 = vmatpush1.msra.mxu0 %v57
    %96 = vmatprep.subr.mxu0 0.0
    %97 = vmatpush1.msra.mxu0 %v58
    %98 = vmatprep.subr.mxu0 0.0
    %99 = vmatpush1.msra.mxu0 %v59
    %100 = vmatprep.subr.mxu0 0.0
    %101 = vmatpush1.msra.mxu0 0.0
    %102 = vmatprep.subr.mxu0 0.0
    %103 = vmatpush1.msra.mxu0 0.0
    %104 = vmatprep.subr.mxu0 0.0
    %105 = vmatpush1.msra.mxu0 0.0
    %106 = vmatprep.subr.mxu0 0.0
    %107 = vmatpush1.msra.mxu0 0.0
    %108 = vmatprep.subr.mxu0 0.0
    %109 = vmatpush1.msra.mxu0 0.0
    %110 = vmatprep.subr.mxu0 0.0
    %111 = vmatpush1.msra.mxu0 0.0
    %112 = vmatprep.subr.mxu0 0.0
    %113 = vmatpush1.msra.mxu0 0.0
    %114 = vmatprep.subr.mxu0 0.0
    %115 = vmatpush1.msra.mxu0 0.0
    %116 = vmatprep.subr.mxu0 0.0
    %117 = vmatpush1.msra.mxu0 0.0
    %118 = vmatprep.subr.mxu0 0.0
    %119 = vmatpush1.msra.mxu0 0.0
    %120 = vmatprep.subr.mxu0 0.0
    %121 = vmatpush1.msra.mxu0 0.0
    %122 = vmatprep.subr.mxu0 0.0
    %123 = vmatpush1.msra.mxu0 0.0
    %124 = vmatprep.subr.mxu0 0.0
    %125 = vmatpush1.msra.mxu0 0.0
    %126 = vmatprep.subr.mxu0 0.0
    %127 = vmatpush1.msra.mxu0 0.0
    %128 = vmatprep.subr.mxu0 0.0
    %129 = vmatpush1.msra.mxu0 0.0
    %130 = vmatprep.subr.mxu0 0.0
    %131 = vmatpush1.msra.mxu0 0.0
    %132 = vmatprep.mubr.f32.mxu0 0.0
    %v133 = vand.u32 %v60, 4294901760
    %v134 = vsub.f32 %v60, %v133
    %v135 = vand.u32 %v134, 4294901760
    %v136 = vsub.f32 %v134, %v135
    %v137 = vand.u32 %v136, 4294901760
    %138 = vmatmul.mubr.f32.gmra.mrb[0].mxu0 %v137
    %v139 = vpop.f32.mrb[0].mxu0
    %v140 = vadd.f32 %v66, %v139
    %v141 = vpop.f32.mrb[0].mxu0
    %142 = vdwg.mxu0
    %143 = vmatprep.subr.mxu0 0.0
    %v144 = vsub.f32 %v44, %v44
    %v145 = vand.u32 %v144, 4294901760
    %v146 = vsub.f32 %v144, %v145
    %v147 = vand.u32 %v146, 4294901760
    %148 = vmatpush1.msra.mxu0 %v147
    %149 = vmatprep.subr.mxu0 0.0
    %v150 = vsub.f32 %v45, %v45
    %v151 = vand.u32 %v150, 4294901760
    %v152 = vsub.f32 %v150, %v151
    %v153 = vand.u32 %v152, 4294901760
    %154 = vmatpush1.msra.mxu0 %v153
    %155 = vmatprep.subr.mxu0 0.0
    %v156 = vsub.f32 %v46, %v46
    %v157 = vand.u32 %v156, 4294901760
    %v158 = vsub.f32 %v156, %v157
    %v159 = vand.u32 %v158, 4294901760
    %160 = vmatpush1.msra.mxu0 %v159
    %161 = vmatprep.subr.mxu0 0.0
    %v162 = vsub.f32 %v47, %v47
    %v163 = vand.u32 %v162, 4294901760
    %v164 = vsub.f32 %v162, %v163
    %v165 = vand.u32 %v164, 4294901760
    %166 = vmatpush1.msra.mxu0 %v165
    %167 = vmatprep.subr.mxu0 0.0
    %v168 = vsub.f32 %v48, %v48
    %v169 = vand.u32 %v168, 4294901760
    %v170 = vsub.f32 %v168, %v169
    %v171 = vand.u32 %v170, 4294901760
    %172 = vmatpush1.msra.mxu0 %v171
    %173 = vmatprep.subr.mxu0 0.0
    %v174 = vsub.f32 %v49, %v49
    %v175 = vand.u32 %v174, 4294901760
    %v176 = vsub.f32 %v174, %v175
    %v177 = vand.u32 %v176, 4294901760
    %178 = vmatpush1.msra.mxu0 %v177
    %179 = vmatprep.subr.mxu0 0.0
    %v180 = vsub.f32 %v50, %v50
    %v181 = vand.u32 %v180, 4294901760
    %v182 = vsub.f32 %v180, %v181
    %v183 = vand.u32 %v182, 4294901760
    %184 = vmatpush1.msra.mxu0 %v183
    %185 = vmatprep.subr.mxu0 0.0
    %v186 = vsub.f32 %v51, %v51
    %v187 = vand.u32 %v186, 4294901760
    %v188 = vsub.f32 %v186, %v187
    %v189 = vand.u32 %v188, 4294901760
    %190 = vmatpush1.msra.mxu0 %v189
    %191 = vmatprep.subr.mxu0 0.0
    %v192 = vsub.f32 %v52, %v52
    %v193 = vand.u32 %v192, 4294901760
    %v194 = vsub.f32 %v192, %v193
    %v195 = vand.u32 %v194, 4294901760
    %196 = vmatpush1.msra.mxu0 %v195
    %197 = vmatprep.subr.mxu0 0.0
    %v198 = vsub.f32 %v53, %v53
    %v199 = vand.u32 %v198, 4294901760
    %v200 = vsub.f32 %v198, %v199
    %v201 = vand.u32 %v200, 4294901760
    %202 = vmatpush1.msra.mxu0 %v201
    %203 = vmatprep.subr.mxu0 0.0
    %v204 = vsub.f32 %v54, %v54
    %v205 = vand.u32 %v204, 4294901760
    %v206 = vsub.f32 %v204, %v205
    %v207 = vand.u32 %v206, 4294901760
    %208 = vmatpush1.msra.mxu0 %v207
    %209 = vmatprep.subr.mxu0 0.0
    %v210 = vsub.f32 %v55, %v55
    %v211 = vand.u32 %v210, 4294901760
    %v212 = vsub.f32 %v210, %v211
    %v213 = vand.u32 %v212, 4294901760
    %214 = vmatpush1.msra.mxu0 %v213
    %215 = vmatprep.subr.mxu0 0.0
    %v216 = vsub.f32 %v56, %v56
    %v217 = vand.u32 %v216, 4294901760
    %v218 = vsub.f32 %v216, %v217
    %v219 = vand.u32 %v218, 4294901760
    %220 = vmatpush1.msra.mxu0 %v219
    %221 = vmatprep.subr.mxu0 0.0
    %v222 = vsub.f32 %v57, %v57
    %v223 = vand.u32 %v222, 4294901760
    %v224 = vsub.f32 %v222, %v223
    %v225 = vand.u32 %v224, 4294901760
    %226 = vmatpush1.msra.mxu0 %v225
    %227 = vmatprep.subr.mxu0 0.0
    %v228 = vsub.f32 %v58, %v58
    %v229 = vand.u32 %v228, 4294901760
    %v230 = vsub.f32 %v228, %v229
    %v231 = vand.u32 %v230, 4294901760
    %232 = vmatpush1.msra.mxu0 %v231
    %233 = vmatprep.subr.mxu0 0.0
    %v234 = vsub.f32 %v59, %v59
    %v235 = vand.u32 %v234, 4294901760
    %v236 = vsub.f32 %v234, %v235
    %v237 = vand.u32 %v236, 4294901760
    %238 = vmatpush1.msra.mxu0 %v237
    %239 = vmatprep.subr.mxu0 0.0
    %240 = vmatpush1.msra.mxu0 0.0
    %241 = vmatprep.subr.mxu0 0.0
    %242 = vmatpush1.msra.mxu0 0.0
    %243 = vmatprep.subr.mxu0 0.0
    %244 = vmatpush1.msra.mxu0 0.0
    %245 = vmatprep.subr.mxu0 0.0
    %246 = vmatpush1.msra.mxu0 0.0
    %247 = vmatprep.subr.mxu0 0.0
    %248 = vmatpush1.msra.mxu0 0.0
    %249 = vmatprep.subr.mxu0 0.0
    %250 = vmatpush1.msra.mxu0 0.0
    %251 = vmatprep.subr.mxu0 0.0
    %252 = vmatpush1.msra.mxu0 0.0
    %253 = vmatprep.subr.mxu0 0.0
    %254 = vmatpush1.msra.mxu0 0.0
    %255 = vmatprep.subr.mxu0 0.0
    %256 = vmatpush1.msra.mxu0 0.0
    %257 = vmatprep.subr.mxu0 0.0
    %258 = vmatpush1.msra.mxu0 0.0
    %259 = vmatprep.subr.mxu0 0.0
    %260 = vmatpush1.msra.mxu0 0.0
    %261 = vmatprep.subr.mxu0 0.0
    %262 = vmatpush1.msra.mxu0 0.0
    %263 = vmatprep.subr.mxu0 0.0
    %264 = vmatpush1.msra.mxu0 0.0
    %265 = vmatprep.subr.mxu0 0.0
    %266 = vmatpush1.msra.mxu0 0.0
    %267 = vmatprep.subr.mxu0 0.0
    %268 = vmatpush1.msra.mxu0 0.0
    %269 = vmatprep.subr.mxu0 0.0
    %270 = vmatpush1.msra.mxu0 0.0
    %271 = vmatprep.mubr.f32.mxu0 0.0
    %v272 = vand.u32 %v60, 4294901760
    %273 = vmatmul.mubr.f32.gmra.mrb[0].mxu0 %v272
    %v274 = vpop.f32.mrb[0].mxu0
    %v275 = vadd.f32 %v140, %v274
    %v276 = vpop.f32.mrb[0].mxu0
    %277 = vdwg.mxu0
    %278 = vmatprep.subr.mxu0 0.0
    %v279 = vsub.f32 %v44, %v44
    %280 = vmatpush1.msra.mxu0 %v279
    %281 = vmatprep.subr.mxu0 0.0
    %v282 = vsub.f32 %v45, %v45
    %283 = vmatpush1.msra.mxu0 %v282
    %284 = vmatprep.subr.mxu0 0.0
    %v285 = vsub.f32 %v46, %v46
    %286 = vmatpush1.msra.mxu0 %v285
    %287 = vmatprep.subr.mxu0 0.0
    %v288 = vsub.f32 %v47, %v47
    %289 = vmatpush1.msra.mxu0 %v288
    %290 = vmatprep.subr.mxu0 0.0
    %v291 = vsub.f32 %v48, %v48
    %292 = vmatpush1.msra.mxu0 %v291
    %293 = vmatprep.subr.mxu0 0.0
    %v294 = vsub.f32 %v49, %v49
    %295 = vmatpush1.msra.mxu0 %v294
    %296 = vmatprep.subr.mxu0 0.0
    %v297 = vsub.f32 %v50, %v50
    %298 = vmatpush1.msra.mxu0 %v297
    %299 = vmatprep.subr.mxu0 0.0
    %v300 = vsub.f32 %v51, %v51
    %301 = vmatpush1.msra.mxu0 %v300
    %302 = vmatprep.subr.mxu0 0.0
    %v303 = vsub.f32 %v52, %v52
    %304 = vmatpush1.msra.mxu0 %v303
    %305 = vmatprep.subr.mxu0 0.0
    %v306 = vsub.f32 %v53, %v53
    %307 = vmatpush1.msra.mxu0 %v306
    %308 = vmatprep.subr.mxu0 0.0
    %v309 = vsub.f32 %v54, %v54
    %310 = vmatpush1.msra.mxu0 %v309
    %311 = vmatprep.subr.mxu0 0.0
    %v312 = vsub.f32 %v55, %v55
    %313 = vmatpush1.msra.mxu0 %v312
    %314 = vmatprep.subr.mxu0 0.0
    %v315 = vsub.f32 %v56, %v56
    %316 = vmatpush1.msra.mxu0 %v315
    %317 = vmatprep.subr.mxu0 0.0
    %v318 = vsub.f32 %v57, %v57
    %319 = vmatpush1.msra.mxu0 %v318
    %320 = vmatprep.subr.mxu0 0.0
    %v321 = vsub.f32 %v58, %v58
    %322 = vmatpush1.msra.mxu0 %v321
    %323 = vmatprep.subr.mxu0 0.0
    %v324 = vsub.f32 %v59, %v59
    %325 = vmatpush1.msra.mxu0 %v324
    %326 = vmatprep.subr.mxu0 0.0
    %327 = vmatpush1.msra.mxu0 0.0
    %328 = vmatprep.subr.mxu0 0.0
    %329 = vmatpush1.msra.mxu0 0.0
    %330 = vmatprep.subr.mxu0 0.0
    %331 = vmatpush1.msra.mxu0 0.0
    %332 = vmatprep.subr.mxu0 0.0
    %333 = vmatpush1.msra.mxu0 0.0
    %334 = vmatprep.subr.mxu0 0.0
    %335 = vmatpush1.msra.mxu0 0.0
    %336 = vmatprep.subr.mxu0 0.0
    %337 = vmatpush1.msra.mxu0 0.0
    %338 = vmatprep.subr.mxu0 0.0
    %339 = vmatpush1.msra.mxu0 0.0
    %340 = vmatprep.subr.mxu0 0.0
    %341 = vmatpush1.msra.mxu0 0.0
    %342 = vmatprep.subr.mxu0 0.0
    %343 = vmatpush1.msra.mxu0 0.0
    %344 = vmatprep.subr.mxu0 0.0
    %345 = vmatpush1.msra.mxu0 0.0
    %346 = vmatprep.subr.mxu0 0.0
    %347 = vmatpush1.msra.mxu0 0.0
    %348 = vmatprep.subr.mxu0 0.0
    %349 = vmatpush1.msra.mxu0 0.0
    %350 = vmatprep.subr.mxu0 0.0
    %351 = vmatpush1.msra.mxu0 0.0
    %352 = vmatprep.subr.mxu0 0.0
    %353 = vmatpush1.msra.mxu0 0.0
    %354 = vmatprep.subr.mxu0 0.0
    %355 = vmatpush1.msra.mxu0 0.0
    %356 = vmatprep.subr.mxu0 0.0
    %357 = vmatpush1.msra.mxu0 0.0
    %358 = vmatprep.mubr.f32.mxu0 0.0
    %v359 = vand.u32 %v60, 4294901760
    %v360 = vsub.f32 %v60, %v359
    %361 = vmatmul.mubr.f32.gmra.mrb[0].mxu0 %v360
    %v362 = vpop.f32.mrb[0].mxu0
    %v363 = vadd.f32 %v275, %v362
    %v364 = vpop.f32.mrb[0].mxu0
    %365 = vdwg.mxu0
    %366 = vmatprep.subr.mxu0 0.0
    %367 = vmatpush1.msra.mxu0 %v44
    %368 = vmatprep.subr.mxu0 0.0
    %369 = vmatpush1.msra.mxu0 %v45
    %370 = vmatprep.subr.mxu0 0.0
    %371 = vmatpush1.msra.mxu0 %v46
    %372 = vmatprep.subr.mxu0 0.0
    %373 = vmatpush1.msra.mxu0 %v47
    %374 = vmatprep.subr.mxu0 0.0
    %375 = vmatpush1.msra.mxu0 %v48
    %376 = vmatprep.subr.mxu0 0.0
    %377 = vmatpush1.msra.mxu0 %v49
    %378 = vmatprep.subr.mxu0 0.0
    %379 = vmatpush1.msra.mxu0 %v50
    %380 = vmatprep.subr.mxu0 0.0
    %381 = vmatpush1.msra.mxu0 %v51
    %382 = vmatprep.subr.mxu0 0.0
    %383 = vmatpush1.msra.mxu0 %v52
    %384 = vmatprep.subr.mxu0 0.0
    %385 = vmatpush1.msra.mxu0 %v53
    %386 = vmatprep.subr.mxu0 0.0
    %387 = vmatpush1.msra.mxu0 %v54
    %388 = vmatprep.subr.mxu0 0.0
    %389 = vmatpush1.msra.mxu0 %v55
    %390 = vmatprep.subr.mxu0 0.0
    %391 = vmatpush1.msra.mxu0 %v56
    %392 = vmatprep.subr.mxu0 0.0
    %393 = vmatpush1.msra.mxu0 %v57
    %394 = vmatprep.subr.mxu0 0.0
    %395 = vmatpush1.msra.mxu0 %v58
    %396 = vmatprep.subr.mxu0 0.0
    %397 = vmatpush1.msra.mxu0 %v59
    %398 = vmatprep.subr.mxu0 0.0
    %399 = vmatpush1.msra.mxu0 0.0
    %400 = vmatprep.subr.mxu0 0.0
    %401 = vmatpush1.msra.mxu0 0.0
    %402 = vmatprep.subr.mxu0 0.0
    %403 = vmatpush1.msra.mxu0 0.0
    %404 = vmatprep.subr.mxu0 0.0
    %405 = vmatpush1.msra.mxu0 0.0
    %406 = vmatprep.subr.mxu0 0.0
    %407 = vmatpush1.msra.mxu0 0.0
    %408 = vmatprep.subr.mxu0 0.0
    %409 = vmatpush1.msra.mxu0 0.0
    %410 = vmatprep.subr.mxu0 0.0
    %411 = vmatpush1.msra.mxu0 0.0
    %412 = vmatprep.subr.mxu0 0.0
    %413 = vmatpush1.msra.mxu0 0.0
    %414 = vmatprep.subr.mxu0 0.0
    %415 = vmatpush1.msra.mxu0 0.0
    %416 = vmatprep.subr.mxu0 0.0
    %417 = vmatpush1.msra.mxu0 0.0
    %418 = vmatprep.subr.mxu0 0.0
    %419 = vmatpush1.msra.mxu0 0.0
    %420 = vmatprep.subr.mxu0 0.0
    %421 = vmatpush1.msra.mxu0 0.0
    %422 = vmatprep.subr.mxu0 0.0
    %423 = vmatpush1.msra.mxu0 0.0
    %424 = vmatprep.subr.mxu0 0.0
    %425 = vmatpush1.msra.mxu0 0.0
    %426 = vmatprep.subr.mxu0 0.0
    %427 = vmatpush1.msra.mxu0 0.0
    %428 = vmatprep.subr.mxu0 0.0
    %429 = vmatpush1.msra.mxu0 0.0
    %430 = vmatprep.mubr.f32.mxu0 0.0
    %v431 = vand.u32 %v60, 4294901760
    %v432 = vsub.f32 %v60, %v431
    %v433 = vand.u32 %v432, 4294901760
    %434 = vmatmul.mubr.f32.gmra.mrb[0].mxu0 %v433
    %v435 = vpop.f32.mrb[0].mxu0
    %v436 = vadd.f32 %v363, %v435
    %v437 = vpop.f32.mrb[0].mxu0
    %438 = vdwg.mxu0
    %439 = vmatprep.subr.mxu0 0.0
    %v440 = vsub.f32 %v44, %v44
    %v441 = vand.u32 %v440, 4294901760
    %442 = vmatpush1.msra.mxu0 %v441
    %443 = vmatprep.subr.mxu0 0.0
    %v444 = vsub.f32 %v45, %v45
    %v445 = vand.u32 %v444, 4294901760
    %446 = vmatpush1.msra.mxu0 %v445
    %447 = vmatprep.subr.mxu0 0.0
    %v448 = vsub.f32 %v46, %v46
    %v449 = vand.u32 %v448, 4294901760
    %450 = vmatpush1.msra.mxu0 %v449
    %451 = vmatprep.subr.mxu0 0.0
    %v452 = vsub.f32 %v47, %v47
    %v453 = vand.u32 %v452, 4294901760
    %454 = vmatpush1.msra.mxu0 %v453
    %455 = vmatprep.subr.mxu0 0.0
    %v456 = vsub.f32 %v48, %v48
    %v457 = vand.u32 %v456, 4294901760
    %458 = vmatpush1.msra.mxu0 %v457
    %459 = vmatprep.subr.mxu0 0.0
    %v460 = vsub.f32 %v49, %v49
    %v461 = vand.u32 %v460, 4294901760
    %462 = vmatpush1.msra.mxu0 %v461
    %463 = vmatprep.subr.mxu0 0.0
    %v464 = vsub.f32 %v50, %v50
    %v465 = vand.u32 %v464, 4294901760
    %466 = vmatpush1.msra.mxu0 %v465
    %467 = vmatprep.subr.mxu0 0.0
    %v468 = vsub.f32 %v51, %v51
    %v469 = vand.u32 %v468, 4294901760
    %470 = vmatpush1.msra.mxu0 %v469
    %471 = vmatprep.subr.mxu0 0.0
    %v472 = vsub.f32 %v52, %v52
    %v473 = vand.u32 %v472, 4294901760
    %474 = vmatpush1.msra.mxu0 %v473
    %475 = vmatprep.subr.mxu0 0.0
    %v476 = vsub.f32 %v53, %v53
    %v477 = vand.u32 %v476, 4294901760
    %478 = vmatpush1.msra.mxu0 %v477
    %479 = vmatprep.subr.mxu0 0.0
    %v480 = vsub.f32 %v54, %v54
    %v481 = vand.u32 %v480, 4294901760
    %482 = vmatpush1.msra.mxu0 %v481
    %483 = vmatprep.subr.mxu0 0.0
    %v484 = vsub.f32 %v55, %v55
    %v485 = vand.u32 %v484, 4294901760
    %486 = vmatpush1.msra.mxu0 %v485
    %487 = vmatprep.subr.mxu0 0.0
    %v488 = vsub.f32 %v56, %v56
    %v489 = vand.u32 %v488, 4294901760
    %490 = vmatpush1.msra.mxu0 %v489
    %491 = vmatprep.subr.mxu0 0.0
    %v492 = vsub.f32 %v57, %v57
    %v493 = vand.u32 %v492, 4294901760
    %494 = vmatpush1.msra.mxu0 %v493
    %495 = vmatprep.subr.mxu0 0.0
    %v496 = vsub.f32 %v58, %v58
    %v497 = vand.u32 %v496, 4294901760
    %498 = vmatpush1.msra.mxu0 %v497
    %499 = vmatprep.subr.mxu0 0.0
    %v500 = vsub.f32 %v59, %v59
    %v501 = vand.u32 %v500, 4294901760
    %502 = vmatpush1.msra.mxu0 %v501
    %503 = vmatprep.subr.mxu0 0.0
    %504 = vmatpush1.msra.mxu0 0.0
    %505 = vmatprep.subr.mxu0 0.0
    %506 = vmatpush1.msra.mxu0 0.0
    %507 = vmatprep.subr.mxu0 0.0
    %508 = vmatpush1.msra.mxu0 0.0
    %509 = vmatprep.subr.mxu0 0.0
    %510 = vmatpush1.msra.mxu0 0.0
    %511 = vmatprep.subr.mxu0 0.0
    %512 = vmatpush1.msra.mxu0 0.0
    %513 = vmatprep.subr.mxu0 0.0
    %514 = vmatpush1.msra.mxu0 0.0
    %515 = vmatprep.subr.mxu0 0.0
    %516 = vmatpush1.msra.mxu0 0.0
    %517 = vmatprep.subr.mxu0 0.0
    %518 = vmatpush1.msra.mxu0 0.0
    %519 = vmatprep.subr.mxu0 0.0
    %520 = vmatpush1.msra.mxu0 0.0
    %521 = vmatprep.subr.mxu0 0.0
    %522 = vmatpush1.msra.mxu0 0.0
    %523 = vmatprep.subr.mxu0 0.0
    %524 = vmatpush1.msra.mxu0 0.0
    %525 = vmatprep.subr.mxu0 0.0
    %526 = vmatpush1.msra.mxu0 0.0
    %527 = vmatprep.subr.mxu0 0.0
    %528 = vmatpush1.msra.mxu0 0.0
    %529 = vmatprep.subr.mxu0 0.0
    %530 = vmatpush1.msra.mxu0 0.0
    %531 = vmatprep.subr.mxu0 0.0
    %532 = vmatpush1.msra.mxu0 0.0
    %533 = vmatprep.subr.mxu0 0.0
    %534 = vmatpush1.msra.mxu0 0.0
    %535 = vmatprep.mubr.f32.mxu0 0.0
    %v536 = vand.u32 %v60, 4294901760
    %537 = vmatmul.mubr.f32.gmra.mrb[0].mxu0 %v536
    %v538 = vpop.f32.mrb[0].mxu0
    %v539 = vadd.f32 %v436, %v538
    %v540 = vpop.f32.mrb[0].mxu0
    %541 = vdwg.mxu0
    %542 = vmatprep.subr.mxu0 0.0
    %543 = vmatpush1.msra.mxu0 %v44
    %544 = vmatprep.subr.mxu0 0.0
    %545 = vmatpush1.msra.mxu0 %v45
    %546 = vmatprep.subr.mxu0 0.0
    %547 = vmatpush1.msra.mxu0 %v46
    %548 = vmatprep.subr.mxu0 0.0
    %549 = vmatpush1.msra.mxu0 %v47
    %550 = vmatprep.subr.mxu0 0.0
    %551 = vmatpush1.msra.mxu0 %v48
    %552 = vmatprep.subr.mxu0 0.0
    %553 = vmatpush1.msra.mxu0 %v49
    %554 = vmatprep.subr.mxu0 0.0
    %555 = vmatpush1.msra.mxu0 %v50
    %556 = vmatprep.subr.mxu0 0.0
    %557 = vmatpush1.msra.mxu0 %v51
    %558 = vmatprep.subr.mxu0 0.0
    %559 = vmatpush1.msra.mxu0 %v52
    %560 = vmatprep.subr.mxu0 0.0
    %561 = vmatpush1.msra.mxu0 %v53
    %562 = vmatprep.subr.mxu0 0.0
    %563 = vmatpush1.msra.mxu0 %v54
    %564 = vmatprep.subr.mxu0 0.0
    %565 = vmatpush1.msra.mxu0 %v55
    %566 = vmatprep.subr.mxu0 0.0
    %567 = vmatpush1.msra.mxu0 %v56
    %568 = vmatprep.subr.mxu0 0.0
    %569 = vmatpush1.msra.mxu0 %v57
    %570 = vmatprep.subr.mxu0 0.0
    %571 = vmatpush1.msra.mxu0 %v58
    %572 = vmatprep.subr.mxu0 0.0
    %573 = vmatpush1.msra.mxu0 %v59
    %574 = vmatprep.subr.mxu0 0.0
    %575 = vmatpush1.msra.mxu0 0.0
    %576 = vmatprep.subr.mxu0 0.0
    %577 = vmatpush1.msra.mxu0 0.0
    %578 = vmatprep.subr.mxu0 0.0
    %579 = vmatpush1.msra.mxu0 0.0
    %580 = vmatprep.subr.mxu0 0.0
    %581 = vmatpush1.msra.mxu0 0.0
    %582 = vmatprep.subr.mxu0 0.0
    %583 = vmatpush1.msra.mxu0 0.0
    %584 = vmatprep.subr.mxu0 0.0
    %585 = vmatpush1.msra.mxu0 0.0
    %586 = vmatprep.subr.mxu0 0.0
    %587 = vmatpush1.msra.mxu0 0.0
    %588 = vmatprep.subr.mxu0 0.0
    %589 = vmatpush1.msra.mxu0 0.0
    %590 = vmatprep.subr.mxu0 0.0
    %591 = vmatpush1.msra.mxu0 0.0
    %592 = vmatprep.subr.mxu0 0.0
    %593 = vmatpush1.msra.mxu0 0.0
    %594 = vmatprep.subr.mxu0 0.0
    %595 = vmatpush1.msra.mxu0 0.0
    %596 = vmatprep.subr.mxu0 0.0
    %597 = vmatpush1.msra.mxu0 0.0
    %598 = vmatprep.subr.mxu0 0.0
    %599 = vmatpush1.msra.mxu0 0.0
    %600 = vmatprep.subr.mxu0 0.0
    %601 = vmatpush1.msra.mxu0 0.0
    %602 = vmatprep.subr.mxu0 0.0
    %603 = vmatpush1.msra.mxu0 0.0
    %604 = vmatprep.subr.mxu0 0.0
    %605 = vmatpush1.msra.mxu0 0.0
    %606 = vmatprep.mubr.f32.mxu0 0.0
    %v607 = vand.u32 %v60, 4294901760
    %608 = vmatmul.mubr.f32.gmra.mrb[0].mxu0 %v607
    %v609 = vpop.f32.mrb[0].mxu0
    %v610 = vadd.f32 %v539, %v609
    %v611 = vpop.f32.mrb[0].mxu0
    %612 = vdwg.mxu0
    %613 = vst [vmem:[%s3] sm:$0x3] %v610
    // Predicated region
    $region18: #{controlnet_forward.1} parent=1 // pred_check
      _
    $region19: #{controlnet_forward.1} parent=1 // pred_check_branch
      %615 = sbr.rel (0) target = $region21
    $region20: #{controlnet_forward.1} parent=1 // pred_region
      _
    $region21: #{controlnet_forward.1} parent=1 // pred_fallthru
      _
    // Predicated region
    $region22: #{controlnet_forward.1} parent=1 // pred_check
      _
    $region23: #{controlnet_forward.1} parent=1 // pred_check_branch
      %617 = sbr.rel (0) target = $region25
    $region24: #{controlnet_forward.1} parent=1 // pred_region
      _
    $region25: #{controlnet_forward.1} parent=1 // pred_fallthru
      _
    %618 = vsyncpa [#allocation3], 1

</llo_original>
